<compile_context>
chip_gen: v7x
topology: tpu7x:2x2x1
jax: 0.10.0
libtpu: 0.0.40
codegen_flags: <defaults>
</compile_context>

<pallas_src>
import jax
import jax.numpy as jnp
from jax.experimental import pallas as pl
from jax.experimental.pallas import tpu as pltpu

_LANES = 512      # lane-dense last dim (multiple of 128 -> unmasked vst)
_MAX_ROWS = 512   # rows per tile (multiple of 8 sublanes)


def _mul_param_kernel(p_ref, x_ref, o_ref):
    # p_ref: (1,) f32 scalar in SMEM; x_ref/o_ref: (tm, _LANES) VMEM tiles.
    o_ref[...] = (x_ref[...] * p_ref[0]).astype(o_ref.dtype)


@jax.jit
def mul_param(p, tensor):
    """JAX/Pallas equivalent of MulParam.forward: return p * tensor."""
    orig_shape = tensor.shape
    dtype = tensor.dtype

    flat = tensor.reshape(-1)
    n = flat.shape[0]

    # Pad to a lane-dense 2D slab whose last dim is a multiple of 128.
    padded = pl.cdiv(n, _LANES) * _LANES
    if padded != n:
        flat = jnp.pad(flat, (0, padded - n))
    rows = padded // _LANES
    x2d = flat.reshape(rows, _LANES)

    # Tile rows: full extent when small, otherwise 512-row tiles.
    # Partial tail blocks (rows % tm != 0) are masked by Pallas; the op is
    # elementwise, so garbage in the padded region is never observed.
    tm = rows if rows <= _MAX_ROWS else _MAX_ROWS
    grid = (pl.cdiv(rows, tm),)

    p_smem = p.reshape(-1).astype(jnp.float32)  # scalar parameter -> SMEM

    out2d = pl.pallas_call(
        _mul_param_kernel,
        out_shape=jax.ShapeDtypeStruct((rows, _LANES), dtype),
        grid=grid,
        in_specs=[
            pl.BlockSpec(memory_space=pltpu.SMEM),         # p (scalar)
            pl.BlockSpec((tm, _LANES), lambda i: (i, 0)),  # tensor tile
        ],
        out_specs=pl.BlockSpec((tm, _LANES), lambda i: (i, 0)),
        compiler_params=pltpu.CompilerParams(
            dimension_semantics=("parallel",),  # shard rows across TCs on v7x
        ),
    )(p_smem, x2d)

    return out2d.reshape(-1)[:n].reshape(orig_shape)


if __name__ == "__main__":
    key = jax.random.PRNGKey(0)

    # Small deterministic input consistent with an arbitrary-tensor forward.
    x = jax.random.normal(key, (2, 4, 16, 16), dtype=jnp.float32)
    # nn.Parameter(torch.ones(1) * 2)
    p = jnp.ones((1,), dtype=jnp.float32) * 2.0

    out = mul_param(p, x)
    out = jax.block_until_ready(out)

    # Verify against the reference semantics: out = p * tensor.
    expected = p * x
    assert out.shape == x.shape and out.dtype == x.dtype
    assert bool(jnp.allclose(out, expected, rtol=1e-6, atol=1e-6))

    print("KERNEL_OK")
</pallas_src>

<mosaic_0001>
module attributes {stable_mosaic.version = 11 : i64} {
  func.func @_mul_param_kernel(%arg0: i32, %arg1: memref<1xf32, #tpu.memory_space<smem>>, %arg2: memref<4x512xf32, #tpu.memory_space<vmem>>, %arg3: memref<4x512xf32, #tpu.memory_space<vmem>>) attributes {dimension_semantics = [#tpu.dimension_semantics<parallel>], iteration_bounds = array<i64: 1>, scalar_prefetch = 0 : i64, scratch_operands = 0 : i64, tpu.core_type = #tpu.core_type<tc>, window_params = [{transform_indices = @transform_0, window_bounds = array<i64: 1>}, {transform_indices = @transform_1, window_bounds = array<i64: 4, 512>}, {transform_indices = @transform_2, window_bounds = array<i64: 4, 512>}]} {
    %c0 = arith.constant 0 : index
    %c0_0 = arith.constant 0 : index
    %0 = vector.load %arg2[%c0, %c0_0] : memref<4x512xf32, #tpu.memory_space<vmem>>, vector<4x512xf32>
    %c0_1 = arith.constant 0 : index
    %1 = memref.load %arg1[%c0_1] : memref<1xf32, #tpu.memory_space<smem>>
    %2 = vector.broadcast %1 : f32 to vector<4x512xf32>
    %3 = arith.mulf %0, %2 : vector<4x512xf32>
    %c0_2 = arith.constant 0 : index
    %c0_3 = arith.constant 0 : index
    %4 = vector.load %arg3[%c0_2, %c0_3] : memref<4x512xf32, #tpu.memory_space<vmem>>, vector<4x512xf32>
    tpu.vector_store %arg3[%c0_2, %c0_3], %3 {strides = array<i32>} : memref<4x512xf32, #tpu.memory_space<vmem>>, vector<4x512xf32>,
    return
  }
  func.func @transform_0(%arg0: i32) -> i32 {
    %c0_i32 = arith.constant 0 : i32
    %c0_i32_0 = arith.constant 0 : i32
    return %c0_i32 : i32
  }
  func.func @transform_1(%arg0: i32) -> (i32, i32) {
    %c0_i32 = arith.constant 0 : i32
    %c0_i32_0 = arith.constant 0 : i32
    return %arg0, %c0_i32 : i32, i32
  }
  func.func @transform_2(%arg0: i32) -> (i32, i32) {
    %c0_i32 = arith.constant 0 : i32
    %c0_i32_0 = arith.constant 0 : i32
    return %arg0, %c0_i32 : i32, i32
  }
}

</mosaic_0001>

<llo_original>
// kernel: mul_param.1
$region0: #{mul_param.1}
  #allocation0 [shape = 'u32[]', space=smem, size = 0x4, offset = 0x4, fixed_abs, tag = 'smem constant byte address 0x4 - core index']
  #allocation1 [shape = 'u32[144,128]{1,0:T(1,128)}', space=vmem, size = 0x12000, scoped, tag = 'internal scratch']
  #allocation2 [shape = 'f32[1]{0:T(128)S(6)}', space=smem, size = 0x200, scoped, tag = 'scoped memory for mul_param.1']
  %s0 = inlined_call_operand.<no memory space> [shape: f32[1], index: 0, kind: input, shape index: {}]
  %s1 = inlined_call_operand.vmem [shape: f32[4,512], index: 1, kind: input, shape index: {}]
  %s2 = inlined_call_operand.vmem [shape: f32[4,512], index: 2, kind: output, shape index: {}]
  %s3 = sld [smem:[#allocation0]]
  $region18: #{mul_param.1} parent=0
    _
  %s5 = ssub.s32 1, %s3
  %s6 = scalar_select 0, %s5, %s3
  %7 = sst [smem:[#allocation2]] %s0
  // Predicated region
  $region2: #{mul_param.1} parent=0 // pred_check
    _
  $region3: #{mul_param.1} parent=0 // pred_check_branch
    %9 = sbr.rel (0) target = $region5
  $region4: #{mul_param.1} parent=0 // pred_region
    _
  $region5: #{mul_param.1} parent=0 // pred_fallthru
    _
  // Predicated region
  $region6: #{mul_param.1} parent=0 // pred_check
    _
  $region7: #{mul_param.1} parent=0 // pred_check_branch
    %11 = sbr.rel (0) target = $region9
  $region8: #{mul_param.1} parent=0 // pred_region
    _
  $region9: #{mul_param.1} parent=0 // pred_fallthru
    _
  %v12 = vld [vmem:[%s1] sm:$0xff]
  %v13 = vld [vmem:[%s1 + $0x8] sm:$0xff]
  %s14 = sld [smem:[#allocation2]]
  %v15 = vstv %s14
  %v16 = vmul.f32 %v12, %v15
  %v17 = vmul.f32 %v13, %v15
  %18 = vst [vmem:[%s2] sm:$0xff] %v16
  %19 = vst [vmem:[%s2 + $0x8] sm:$0xff] %v17
  // Predicated region
  $region10: #{mul_param.1} parent=0 // pred_check
    _
  $region11: #{mul_param.1} parent=0 // pred_check_branch
    %21 = sbr.rel (0) target = $region13
  $region12: #{mul_param.1} parent=0 // pred_region
    _
  $region13: #{mul_param.1} parent=0 // pred_fallthru
    _
  // Predicated region
  $region14: #{mul_param.1} parent=0 // pred_check
    _
  $region15: #{mul_param.1} parent=0 // pred_check_branch
    %23 = sbr.rel (0) target = $region17
  $region16: #{mul_param.1} parent=0 // pred_region
    _
  $region17: #{mul_param.1} parent=0 // pred_fallthru
    _

</llo_original>
